<compile_context>
chip_gen: v7x
topology: tpu7x:2x2x1
jax: 0.10.0
libtpu: 0.0.40
codegen_flags: <defaults>
</compile_context>

<pallas_src>
import functools
from collections import defaultdict

import jax
import jax.numpy as jnp
from jax.experimental import pallas as pl
from jax.experimental.pallas import tpu as pltpu


# (sign on z, sign on eps) so that activation = sigmoid(sign_z * B * z + sign_e * eps)
_SIGMOID_SIGNS = {
    '>':  (1.0, -1.0),
    '>=': (1.0,  1.0),
    '<':  (-1.0, -1.0),
    '<=': (-1.0,  1.0),
}

_SMALL_INPUT_BYTES = 256 * 1024          # below this, XLA fusion beats a pallas_call
_TARGET_BLOCK_BYTES = 4 * 1024 * 1024    # ~4 MiB x-blocks (~8 MiB double-buffered)
_MIN_GRID_STEPS = 8                      # keep both v7x TensorCores busy


def _make_ineq_kernel(op_str):
    """Kernel factory; the comparison op is static so it is baked at trace time."""

    def kernel(params_ref, w_ref, x_ref, o_ref):
        b = params_ref[0]      # SMEM scalars
        Bv = params_ref[1]     # already clamped (min 0.1) in the wrapper
        ev = params_ref[2]     # already clamped (min 0.5) in the wrapper

        # z = x @ w_col - b   -> shape (block_rows, 1), f32 accumulation
        z = jnp.dot(x_ref[...], w_ref[...], preferred_element_type=jnp.float32)
        z = z - b

        if op_str == '=':
            # TODO(synk): original gaussian() takes (data, k) but the torch
            # forward calls op(out, B, eps) with 3 args (would TypeError);
            # we implement the evident intent exp(-0.5*(z/B)^2), eps unused.
            act = jnp.exp(-0.5 * (z * (1.0 / Bv)) ** 2)
        else:
            sign_z, sign_e = _SIGMOID_SIGNS[op_str]
            t = sign_z * Bv * z + sign_e * ev
            act = 1.0 / (1.0 + jnp.exp(-t))

        o_ref[...] = act.astype(o_ref.dtype)

    return kernel


def _choose_block_rows(batch, n_vars, itemsize):
    """Largest batch-tile that (a) stays ~4 MiB and (b) keeps >= ~8 grid steps."""
    if batch <= 8:
        return batch
    bytes_per_row = max(1, n_vars * itemsize)
    rows_for_target = max(8, _TARGET_BLOCK_BYTES // bytes_per_row)
    rows_for_grid = max(8, pl.cdiv(batch, _MIN_GRID_STEPS))
    block_rows = min(rows_for_target, rows_for_grid, batch)
    block_rows = max(8, (block_rows // 8) * 8)
    return min(block_rows, batch)


def ineq_constraint_ref(x, xn, weight, b, B, eps, op_str):
    """Pure-JAX reference of IneqConstraint.forward (xn unused, as in torch)."""
    del xn
    Bc = jnp.maximum(B, 0.1)
    ec = jnp.maximum(eps, 0.5)
    z = x.astype(jnp.float32) @ weight.reshape(-1).astype(jnp.float32) - b.reshape(())
    if op_str == '=':
        act = jnp.exp(-0.5 * (z / Bc.reshape(())) ** 2)
    else:
        sz, se = _SIGMOID_SIGNS[op_str]
        act = jax.nn.sigmoid(sz * Bc.reshape(()) * z + se * ec.reshape(()))
    return act.astype(x.dtype)


def ineq_constraint_forward(x, xn, weight, b, B, eps, op_str, *,
                            block_rows=None, force_pallas=False):
    """Pallas implementation of IneqConstraint.forward(x, xn) -> (batch,)."""
    assert x.ndim == 2, "x must be (batch, n_vars)"
    batch, n_vars = x.shape
    assert weight.size == n_vars

    # Tiny inputs: a single-step pallas_call is pure launch overhead; let XLA fuse.
    if not force_pallas and x.size * x.dtype.itemsize < _SMALL_INPUT_BYTES:
        return ineq_constraint_ref(x, xn, weight, b, B, eps, op_str)

    # Functional equivalent of the in-place no-grad clamps.
    b_s = jnp.asarray(b, jnp.float32).reshape(())
    B_s = jnp.maximum(jnp.asarray(B, jnp.float32).reshape(()), 0.1)
    e_s = jnp.maximum(jnp.asarray(eps, jnp.float32).reshape(()), 0.5)
    params = jnp.stack([b_s, B_s, e_s])                      # (3,) f32 -> SMEM

    w_col = weight.reshape(n_vars, 1).astype(x.dtype)        # weight^T column

    if block_rows is None:
        block_rows = _choose_block_rows(batch, n_vars, x.dtype.itemsize)
    grid = (pl.cdiv(batch, block_rows),)

    out = pl.pallas_call(
        _make_ineq_kernel(op_str),
        out_shape=jax.ShapeDtypeStruct((batch, 1), x.dtype),
        grid=grid,
        in_specs=[
            pl.BlockSpec(memory_space=pltpu.MemorySpace.SMEM),          # params (3,)
            pl.BlockSpec((n_vars, 1), lambda i: (0, 0)),                # weight column
            pl.BlockSpec((block_rows, n_vars), lambda i: (i, 0)),       # x batch tile
        ],
        out_specs=pl.BlockSpec((block_rows, 1), lambda i: (i, 0)),
        compiler_params=pltpu.CompilerParams(
            dimension_semantics=("parallel",),
            vmem_limit_bytes=32 * 1024 * 1024,
        ),
    )(params, w_col, x)

    return out.reshape(batch)    # matches torch .squeeze() of the (batch, 1) linear


class IneqConstraint:
    """Light JAX mirror of the torch module (holds parameters, calls the kernel)."""

    def __init__(self, coeffs, var_names, op_str):
        coeffs = defaultdict(lambda: 0.0, coeffs)
        coeff_w = [coeffs[var] for var in var_names]
        self.weight = jnp.asarray(coeff_w, dtype=jnp.float32).reshape(1, -1)
        self.b = jnp.asarray([0.0], dtype=jnp.float32)
        self.B = jnp.asarray([0.5], dtype=jnp.float32)
        self.eps = jnp.asarray([0.5], dtype=jnp.float32)
        self.op_str = op_str

    def forward(self, x, xn, **kw):
        return ineq_constraint_forward(x, xn, self.weight, self.b, self.B,
                                       self.eps, self.op_str, **kw)


if __name__ == "__main__":
    key = jax.random.PRNGKey(0)
    kx, kxn = jax.random.split(key)

    batch, n_vars = 128, 16
    var_names = [f"v{i}" for i in range(n_vars)]
    coeffs = {"v0": 1.0, "v2": -2.0, "v5": 0.5, "v9": 3.0}
    op_str = "<="

    mod = IneqConstraint(coeffs, var_names, op_str)

    x = jax.random.normal(kx, (batch, n_vars), dtype=jnp.float32)
    xn = jax.random.normal(kxn, (batch, n_vars), dtype=jnp.float32)  # unused by forward

    # Force the Pallas path even at this small smoke-test size.
    out = mod.forward(x, xn, force_pallas=True)
    out = jax.block_until_ready(out)

    ref = ineq_constraint_ref(x, xn, mod.weight, mod.b, mod.B, mod.eps, op_str)
    assert out.shape == (batch,)
    assert jnp.allclose(out, ref, atol=1e-5, rtol=1e-5)

    # Default dispatch (small input -> XLA fallback) must agree too.
    out_auto = jax.block_until_ready(mod.forward(x, xn))
    assert jnp.allclose(out_auto, ref, atol=1e-5, rtol=1e-5)

    print("KERNEL_OK")
</pallas_src>

<mosaic_0001>
module attributes {stable_mosaic.version = 11 : i64} {
  func.func @kernel(%arg0: i32, %arg1: memref<3xf32, #tpu.memory_space<smem>>, %arg2: memref<16x1xf32, #tpu.memory_space<vmem>>, %arg3: memref<16x16xf32, #tpu.memory_space<vmem>>, %arg4: memref<16x1xf32, #tpu.memory_space<vmem>>) attributes {dimension_semantics = [#tpu.dimension_semantics<parallel>], iteration_bounds = array<i64: 8>, scalar_prefetch = 0 : i64, scratch_operands = 0 : i64, tpu.core_type = #tpu.core_type<tc>, window_params = [{transform_indices = @transform_0, window_bounds = array<i64: 3>}, {pipeline_mode = #tpu.pipeline_mode<synchronous>, transform_indices = @transform_1, window_bounds = array<i64: 16, 1>}, {transform_indices = @transform_2, window_bounds = array<i64: 16, 16>}, {transform_indices = @transform_3, window_bounds = array<i64: 16, 1>}]} {
    %c0 = arith.constant 0 : index
    %0 = memref.load %arg1[%c0] : memref<3xf32, #tpu.memory_space<smem>>
    %c1 = arith.constant 1 : index
    %1 = memref.load %arg1[%c1] : memref<3xf32, #tpu.memory_space<smem>>
    %c2 = arith.constant 2 : index
    %2 = memref.load %arg1[%c2] : memref<3xf32, #tpu.memory_space<smem>>
    %c0_0 = arith.constant 0 : index
    %c0_1 = arith.constant 0 : index
    %3 = vector.load %arg3[%c0_0, %c0_1] : memref<16x16xf32, #tpu.memory_space<vmem>>, vector<16x16xf32>
    %c0_2 = arith.constant 0 : index
    %c0_3 = arith.constant 0 : index
    %4 = vector.load %arg2[%c0_2, %c0_3] : memref<16x1xf32, #tpu.memory_space<vmem>>, vector<16x1xf32>
    %cst = arith.constant dense<0.000000e+00> : vector<16x1xf32>
    %5 = tpu.matmul %3, %4, %cst {dimension_numbers = #tpu.dot_dimension_numbers<[1], [0], [0], [1], [0, 0, 1, 1], [], []>} : vector<16x16xf32>, vector<16x1xf32>, vector<16x1xf32> -> vector<16x1xf32>
    %6 = vector.broadcast %0 : f32 to vector<16x1xf32>
    %7 = arith.subf %5, %6 : vector<16x1xf32>
    %cst_4 = arith.constant -1.000000e+00 : f32
    %8 = arith.mulf %cst_4, %1 : f32
    %9 = vector.broadcast %8 : f32 to vector<16x1xf32>
    %10 = arith.mulf %9, %7 : vector<16x1xf32>
    %cst_5 = arith.constant 1.000000e+00 : f32
    %11 = arith.mulf %cst_5, %2 : f32
    %12 = vector.broadcast %11 : f32 to vector<16x1xf32>
    %13 = arith.addf %10, %12 : vector<16x1xf32>
    %cst_6 = arith.constant 0.000000e+00 : f32
    %14 = vector.broadcast %cst_6 : f32 to vector<16x1xf32>
    %15 = arith.subf %14, %13 : vector<16x1xf32>
    %16 = math.exp %15 : vector<16x1xf32>
    %cst_7 = arith.constant 1.000000e+00 : f32
    %17 = vector.broadcast %cst_7 : f32 to vector<16x1xf32>
    %18 = arith.addf %17, %16 : vector<16x1xf32>
    %cst_8 = arith.constant 1.000000e+00 : f32
    %19 = vector.broadcast %cst_8 : f32 to vector<16x1xf32>
    %20 = arith.divf %19, %18 : vector<16x1xf32>
    %c0_9 = arith.constant 0 : index
    %c0_10 = arith.constant 0 : index
    %21 = vector.load %arg4[%c0_9, %c0_10] : memref<16x1xf32, #tpu.memory_space<vmem>>, vector<16x1xf32>
    tpu.vector_store %arg4[%c0_9, %c0_10], %20 {strides = array<i32>} : memref<16x1xf32, #tpu.memory_space<vmem>>, vector<16x1xf32>,
    return
  }
  func.func @transform_0(%arg0: i32) -> i32 {
    %c0_i32 = arith.constant 0 : i32
    %c0_i32_0 = arith.constant 0 : i32
    return %c0_i32 : i32
  }
  func.func @transform_1(%arg0: i32) -> (i32, i32) {
    %c0_i32 = arith.constant 0 : i32
    %c0_i32_0 = arith.constant 0 : i32
    %c0_i32_1 = arith.constant 0 : i32
    return %c0_i32, %c0_i32_0 : i32, i32
  }
  func.func @transform_2(%arg0: i32) -> (i32, i32) {
    %c0_i32 = arith.constant 0 : i32
    %c0_i32_0 = arith.constant 0 : i32
    return %arg0, %c0_i32 : i32, i32
  }
  func.func @transform_3(%arg0: i32) -> (i32, i32) {
    %c0_i32 = arith.constant 0 : i32
    %c0_i32_0 = arith.constant 0 : i32
    return %arg0, %c0_i32 : i32, i32
  }
}

</mosaic_0001>

<llo_original>
// kernel: tpu_custom_call.1
$region0: #{tpu_custom_call.1}
  #allocation0 [shape = 'u32[]', space=smem, size = 0x4, offset = 0x4, fixed_abs, tag = 'smem constant byte address 0x4 - core index']
  #allocation1 [shape = 'u32[144,128]{1,0:T(1,128)}', space=vmem, size = 0x12000, scoped, tag = 'internal scratch']
  %s0 = inlined_call_operand.vmem [shape: f32[3], index: 0, kind: input, shape index: {}]
  %s1 = inlined_call_operand.vmem [shape: f32[16,1], index: 1, kind: input, shape index: {}]
  %s2 = inlined_call_operand.vmem [shape: f32[128,16], index: 2, kind: input, shape index: {}]
  %s3 = inlined_call_operand.vmem [shape: f32[128,1], index: 3, kind: output, shape index: {}]
  %s4 = sld [smem:[#allocation0]]
  $region49: #{tpu_custom_call.1} parent=0
    _
  %s6 = ssub.s32 1, %s4
  %s7 = scalar_select 0, %s6, %s4
  $region1: #{tpu_custom_call.1} parent=0
    #allocation2 [shape = 'u8[512]{0}', space=smem, size = 0x200, scoped, tag = 'input window, operand 0, single buffered']
    #allocation3 [shape = 's32[2]{0}', space=sflag, size = 0x8, scoped, tag = 'scoped memory for tpu_custom_call.1']
    %8 = vsyncpa [#allocation3], 0
    loop: start=0, step=1, limit=10
    $region2: #{tpu_custom_call.1} parent=1 // loop_pre_header
      _
    $region3: #{tpu_custom_call.1} parent=1 // loop_header
      %s10 = sphi 0, %s14
      %p11 = scmp.ge.s32.totalorder %s10, 10
      %s18 = sphi 0, %s18
      %s20 = sphi 0, %s18
      %s21 = sphi 0, %s20
      %s35 = sphi 0, %s21
      %s39 = sphi 0, %s39
      %s41 = sphi 0, %s39
      %s42 = sphi 0, %s41
      %s56 = sphi 0, %s42
      %s62 = sphi 0, %s64
      %s65 = sphi 0, %s62
      %s66 = sphi 0, %s65
      %s82 = sphi 0, %s66
      %s88 = sphi 0, %s90
      %s91 = sphi 0, %s88
      %s92 = sphi 0, %s91
      %s108 = sphi 0, %s92
    $region4: #{tpu_custom_call.1} parent=1 // loop_header_branch
      %13 = sbr.rel (%p11) target = $region8
    $region5: #{tpu_custom_call.1} parent=1 // loop_body
      %s15 = ssub.s32 %s10, 1
      %s16 = ssub.s32 %s10, 2
      %s17 = sadd.s32 %s10, 1
      %s19 = sadd.s32 %s18, 1
      %p22 = scmp.eq.s32.totalorder %s10, 7
      %p23 = scmp.ne.s32.totalorder %s18, %s20
      %p24 = scmp.eq.s32.totalorder %s10, 0
      %p25 = por %p23, %p24
      %p26 = scmp.ne.s32.totalorder %s18, %s20
      %p27 = scmp.eq.s32.totalorder %s15, 7
      %p28 = por %p26, %p27
      %p29 = scmp.ne.s32.totalorder %s20, %s21
      %p30 = scmp.eq.s32.totalorder %s15, 0
      %p31 = por %p29, %p30
      %p32 = scmp.ne.s32.totalorder %s20, %s21
      %p33 = scmp.eq.s32.totalorder %s16, 7
      %p34 = por %p32, %p33
      %p36 = scmp.ne.s32.totalorder %s21, %s35
      %p37 = scmp.eq.s32.totalorder %s16, 0
      %p38 = por %p36, %p37
      %s40 = sadd.s32 %s39, 1
      %p43 = scmp.eq.s32.totalorder %s10, 7
      %p44 = scmp.ne.s32.totalorder %s39, %s41
      %p45 = scmp.eq.s32.totalorder %s10, 0
      %p46 = por %p44, %p45
      %p47 = scmp.ne.s32.totalorder %s39, %s41
      %p48 = scmp.eq.s32.totalorder %s15, 7
      %p49 = por %p47, %p48
      %p50 = scmp.ne.s32.totalorder %s41, %s42
      %p51 = scmp.eq.s32.totalorder %s15, 0
      %p52 = por %p50, %p51
      %p53 = scmp.ne.s32.totalorder %s41, %s42
      %p54 = scmp.eq.s32.totalorder %s16, 7
      %p55 = por %p53, %p54
      %p57 = scmp.ne.s32.totalorder %s42, %s56
      %p58 = scmp.eq.s32.totalorder %s16, 0
      %p59 = por %p57, %p58
      %s60 = ssub.s32 %s10, %s17
      %p61 = scmp.eq.s32.totalorder %s60, 0
      %s63 = sadd.s32 %s62, 1
      %s64 = scalar_select %p61, %s62, %s63
      %p67 = pneg %p61
      %p68 = scmp.eq.s32.totalorder %s10, 7
      %p69 = por %p67, %p68
      %p70 = scmp.ne.s32.totalorder %s62, %s65
      %p71 = scmp.eq.s32.totalorder %s10, 0
      %p72 = por %p70, %p71
      %p73 = scmp.ne.s32.totalorder %s62, %s65
      %p74 = scmp.eq.s32.totalorder %s15, 7
      %p75 = por %p73, %p74
      %p76 = scmp.ne.s32.totalorder %s65, %s66
      %p77 = scmp.eq.s32.totalorder %s15, 0
      %p78 = por %p76, %p77
      %p79 = scmp.ne.s32.totalorder %s65, %s66
      %p80 = scmp.eq.s32.totalorder %s16, 7
      %p81 = por %p79, %p80
      %p83 = scmp.ne.s32.totalorder %s66, %s82
      %p84 = scmp.eq.s32.totalorder %s16, 0
      %p85 = por %p83, %p84
      %s86 = ssub.s32 %s10, %s17
      %p87 = scmp.eq.s32.totalorder %s86, 0
      %s89 = sadd.s32 %s88, 1
      %s90 = scalar_select %p87, %s88, %s89
      %p93 = pneg %p87
      %p94 = scmp.eq.s32.totalorder %s10, 7
      %p95 = por %p93, %p94
      %p96 = scmp.ne.s32.totalorder %s88, %s91
      %p97 = scmp.eq.s32.totalorder %s10, 0
      %p98 = por %p96, %p97
      %p99 = scmp.ne.s32.totalorder %s88, %s91
      %p100 = scmp.eq.s32.totalorder %s15, 7
      %p101 = por %p99, %p100
      %p102 = scmp.ne.s32.totalorder %s91, %s92
      %p103 = scmp.eq.s32.totalorder %s15, 0
      %p104 = por %p102, %p103
      %p105 = scmp.ne.s32.totalorder %s91, %s92
      %p106 = scmp.eq.s32.totalorder %s16, 7
      %p107 = por %p105, %p106
      %p109 = scmp.ne.s32.totalorder %s92, %s108
      %p110 = scmp.eq.s32.totalorder %s16, 0
      %p111 = por %p109, %p110
      %p112 = scmp.le.s32.totalorder 1, %s10
      %p113 = scmp.lt.s32.totalorder %s10, 9
      %p114 = pnand %p112, %p113
      %p115 = pneg %p114
      // Predicated region
      $region9: #{tpu_custom_call.1} parent=5 // pred_check
        _
      $region10: #{tpu_custom_call.1} parent=5 // pred_check_branch
        %117 = sbr.rel (%p114) target = $region12
      $region11: #{tpu_custom_call.1} parent=5 // pred_region
        %s118 = ssub.s32 %s10, 1
        // Predicated region
        $region13: #{tpu_custom_call.1} parent=11 // pred_check
          %p119 = pneg %p31
        $region14: #{tpu_custom_call.1} parent=11 // pred_check_branch
          %121 = sbr.rel (%p119) target = $region16
        $region15: #{tpu_custom_call.1} parent=11 // pred_region
          %s123 = ssub.s32 16, 16
          %124 = vsyncadd [#allocation3], %s123
          %s126 = sshll.u32 %s0, 4
          %s127 = int_to_ptr.vmem [resolvable:$true] %s126
          %129 = dma.vmem_to_smem %s127, 16, [#allocation2], [#allocation3]
        $region16: #{tpu_custom_call.1} parent=11 // pred_fallthru
          _
        // Predicated region
        $region17: #{tpu_custom_call.1} parent=11 // pred_check
          %p130 = pneg %p52
        $region18: #{tpu_custom_call.1} parent=11 // pred_check_branch
          %132 = sbr.rel (%p130) target = $region20
        $region19: #{tpu_custom_call.1} parent=11 // pred_region
          _
        $region20: #{tpu_custom_call.1} parent=11 // pred_fallthru
          _
      $region12: #{tpu_custom_call.1} parent=5 // pred_fallthru
        _
      %p133 = scmp.lt.s32.totalorder %s10, 8
      // Predicated region
      $region21: #{tpu_custom_call.1} parent=5 // pred_check
        %p134 = pneg %p133
      $region22: #{tpu_custom_call.1} parent=5 // pred_check_branch
        %136 = sbr.rel (%p134) target = $region24
      $region23: #{tpu_custom_call.1} parent=5 // pred_region
        // Predicated region
        $region25: #{tpu_custom_call.1} parent=23 // pred_check
          %p137 = pneg %p72
        $region26: #{tpu_custom_call.1} parent=23 // pred_check_branch
          %139 = sbr.rel (%p137) target = $region28
        $region27: #{tpu_custom_call.1} parent=23 // pred_region
          %s140 = smul.u32 2, %s10
          %p141 = scmp.lt.s32.totalorder %s140, 15
          %s142 = scalar_select %p141, %s140, 15
          %s143 = smul.addr %s142, 8
          %s144 = scalar_lea.vmem %s2, %s143
          %s145 = smul.u32 2, %s10
        $region28: #{tpu_custom_call.1} parent=23 // pred_fallthru
          _
      $region24: #{tpu_custom_call.1} parent=5 // pred_fallthru
        _
      %p146 = scmp.le.s32.totalorder 1, %s10
      %p147 = scmp.lt.s32.totalorder %s10, 9
      %p148 = pnand %p146, %p147
      %p149 = pneg %p148
      // Predicated region
      $region29: #{tpu_custom_call.1} parent=5 // pred_check
        _
      $region30: #{tpu_custom_call.1} parent=5 // pred_check_branch
        %151 = sbr.rel (%p148) target = $region32
      $region31: #{tpu_custom_call.1} parent=5 // pred_region
        %s152 = ssub.s32 %s10, 1
        // Predicated region
        $region33: #{tpu_custom_call.1} parent=31 // pred_check
          %p153 = pneg %p31
        $region34: #{tpu_custom_call.1} parent=31 // pred_check_branch
          %155 = sbr.rel (%p153) target = $region36
        $region35: #{tpu_custom_call.1} parent=31 // pred_region
          %156 = dma.done [#allocation3], 16
        $region36: #{tpu_custom_call.1} parent=31 // pred_fallthru
          _
        %157 = sfence
        %p158 = pneg %p31
        %p159 = pneg %p28
        %p160 = pneg %p52
        %p161 = pneg %p49
        %s162 = smul.u32 2, %s15
        %p163 = scmp.lt.s32.totalorder %s162, 15
        %s164 = scalar_select %p163, %s162, 15
        %s165 = smul.addr %s164, 8
        %s166 = scalar_lea.vmem %s2, %s165
        %p167 = pneg %p78
        %p168 = pneg %p75
        %p169 = pneg %p104
        %p170 = pneg %p101
        %s171 = smul.u32 2, %s15
        %p172 = scmp.lt.s32.totalorder %s171, 15
        %s173 = scalar_select %p172, %s171, 15
        %s174 = smul.addr %s173, 8
        %s175 = scalar_lea.vmem %s3, %s174
        %s176 = smul.u32 2, %s15
        %p177 = scmp.lt.s32.totalorder %s176, 15
        %s178 = scalar_select %p177, %s176, 15
        %s179 = smul.addr %s178, 8
        %s180 = scalar_lea.vmem %s2, %s179
        %s181 = smul.u32 2, %s15
        %s182 = smul.u32 2, %s15
        %p183 = scmp.lt.s32.totalorder %s182, 15
        %s184 = scalar_select %p183, %s182, 15
        %s185 = smul.addr %s184, 8
        %s186 = scalar_lea.vmem %s3, %s185
        %s187 = smul.u32 2, %s15
        %s188 = sld [smem:[#allocation2]]
        %s189 = sld [smem:[#allocation2 + $0x1]]
        %s190 = sld [smem:[#allocation2 + $0x2]]
        %v191 = vld [vmem:[%s180] sm:$0xff]
        %v192 = vld [vmem:[%s180 + $0x8] sm:$0xff]
        %v193 = vld [vmem:[%s1] sm:$0xff]
        %v194 = vld [vmem:[%s1 + $0x8] sm:$0xff]
        %vm195 = vcmask 130048
        %v197 = vsel %vm195, %v191, 0
        %v200 = vsel %vm195, %v192, 0
        %202 = vmatprep.subr.mxu0 0.0
        %203 = vmatpush1.msra.mxu0 %v193
        %204 = vmatprep.subr.mxu0 0.0
        %205 = vmatpush1.msra.mxu0 %v194
        %206 = vmatprep.subr.mxu0 0.0
        %207 = vmatpush1.msra.mxu0 0.0
        %208 = vmatprep.subr.mxu0 0.0
        %209 = vmatpush1.msra.mxu0 0.0
        %210 = vmatprep.subr.mxu0 0.0
        %211 = vmatpush1.msra.mxu0 0.0
        %212 = vmatprep.subr.mxu0 0.0
        %213 = vmatpush1.msra.mxu0 0.0
        %214 = vmatprep.subr.mxu0 0.0
        %215 = vmatpush1.msra.mxu0 0.0
        %216 = vmatprep.subr.mxu0 0.0
        %217 = vmatpush1.msra.mxu0 0.0
        %218 = vmatprep.subr.mxu0 0.0
        %219 = vmatpush1.msra.mxu0 0.0
        %220 = vmatprep.subr.mxu0 0.0
        %221 = vmatpush1.msra.mxu0 0.0
        %222 = vmatprep.subr.mxu0 0.0
        %223 = vmatpush1.msra.mxu0 0.0
        %224 = vmatprep.subr.mxu0 0.0
        %225 = vmatpush1.msra.mxu0 0.0
        %226 = vmatprep.subr.mxu0 0.0
        %227 = vmatpush1.msra.mxu0 0.0
        %228 = vmatprep.subr.mxu0 0.0
        %229 = vmatpush1.msra.mxu0 0.0
        %230 = vmatprep.subr.mxu0 0.0
        %231 = vmatpush1.msra.mxu0 0.0
        %232 = vmatprep.subr.mxu0 0.0
        %233 = vmatpush1.msra.mxu0 0.0
        %234 = vmatprep.subr.mxu0 0.0
        %235 = vmatpush1.msra.mxu0 0.0
        %236 = vmatprep.subr.mxu0 0.0
        %237 = vmatpush1.msra.mxu0 0.0
        %238 = vmatprep.subr.mxu0 0.0
        %239 = vmatpush1.msra.mxu0 0.0
        %240 = vmatprep.subr.mxu0 0.0
        %241 = vmatpush1.msra.mxu0 0.0
        %242 = vmatprep.subr.mxu0 0.0
        %243 = vmatpush1.msra.mxu0 0.0
        %244 = vmatprep.subr.mxu0 0.0
        %245 = vmatpush1.msra.mxu0 0.0
        %246 = vmatprep.subr.mxu0 0.0
        %247 = vmatpush1.msra.mxu0 0.0
        %248 = vmatprep.subr.mxu0 0.0
        %249 = vmatpush1.msra.mxu0 0.0
        %250 = vmatprep.subr.mxu0 0.0
        %251 = vmatpush1.msra.mxu0 0.0
        %252 = vmatprep.subr.mxu0 0.0
        %253 = vmatpush1.msra.mxu0 0.0
        %254 = vmatprep.subr.mxu0 0.0
        %255 = vmatpush1.msra.mxu0 0.0
        %256 = vmatprep.subr.mxu0 0.0
        %257 = vmatpush1.msra.mxu0 0.0
        %258 = vmatprep.subr.mxu0 0.0
        %259 = vmatpush1.msra.mxu0 0.0
        %260 = vmatprep.subr.mxu0 0.0
        %261 = vmatpush1.msra.mxu0 0.0
        %262 = vmatprep.subr.mxu0 0.0
        %263 = vmatpush1.msra.mxu0 0.0
        %264 = vmatprep.subr.mxu0 0.0
        %265 = vmatpush1.msra.mxu0 0.0
        %266 = vmatprep.mubr.f32.mxu0 0.0
        %267 = vmatmul.mubr.f32.gmra.mrb[0].mxu0 %v197
        %v268 = vpop.f32.mrb[0].mxu0
        %v269 = vadd.f32 0.0, %v268
        %v270 = vpop.f32.mrb[0].mxu0
        %271 = vmatprep.mubr.f32.mxu0 0.0
        %272 = vmatmul.mubr.f32.gmra.mrb[0].mxu0 %v200
        %v273 = vpop.f32.mrb[0].mxu0
        %v274 = vadd.f32 0.0, %v273
        %v275 = vpop.f32.mrb[0].mxu0
        %276 = vdwg.mxu0
        %v277 = vstv %s188
        %v278 = vsub.f32 %v269, %v277
        %v279 = vsub.f32 %v274, %v277
        %s280 = smul.f32 %s189, -1.0
        %v281 = vstv %s280
        %v282 = vmul.f32 %v281, %v278
        %v283 = vmul.f32 %v281, %v279
        %v284 = vstv %s190
        %v285 = vadd.f32 %v282, %v284
        %v286 = vadd.f32 %v283, %v284
        %v287 = vsub.f32 0.0, %v285
        %v288 = vsub.f32 0.0, %v286
        %v289 = vmul.f32 %v287, 1.442695
        %v290 = vpow.pop %v289
        %v291 = vmul.f32 %v288, 1.442695
        %v292 = vpow.pop %v291
        %v293 = vadd.f32 %v290, 1.0
        %v294 = vadd.f32 %v292, 1.0
        %v295 = vrcp.pop %v293
        %v296 = vmul.f32 1.0, %v295
        %v297 = vrcp.pop %v294
        %v298 = vmul.f32 1.0, %v297
        %vm299 = vcmask 7168
        %300 = vst.msk [vmem:[%s186] sm:$0xff] %vm299, %v296
        %301 = vst.msk [vmem:[%s186 + $0x8] sm:$0xff] %vm299, %v298
        %s302 = smul.u32 2, %s15
        %p303 = scmp.lt.s32.totalorder %s302, 15
        %s304 = scalar_select %p303, %s302, 15
        %s305 = smul.addr %s304, 8
        %s306 = scalar_lea.vmem %s3, %s305
        // Predicated region
        $region37: #{tpu_custom_call.1} parent=31 // pred_check
          %p307 = pneg %p101
        $region38: #{tpu_custom_call.1} parent=31 // pred_check_branch
          %309 = sbr.rel (%p307) target = $region40
        $region39: #{tpu_custom_call.1} parent=31 // pred_region
          %s310 = smul.u32 2, %s15
        $region40: #{tpu_custom_call.1} parent=31 // pred_fallthru
          _
      $region32: #{tpu_custom_call.1} parent=5 // pred_fallthru
        _
      %p311 = scmp.le.s32.totalorder 2, %s10
      // Predicated region
      $region41: #{tpu_custom_call.1} parent=5 // pred_check
        %p312 = pneg %p311
      $region42: #{tpu_custom_call.1} parent=5 // pred_check_branch
        %314 = sbr.rel (%p312) target = $region44
      $region43: #{tpu_custom_call.1} parent=5 // pred_region
        %s315 = ssub.s32 %s10, 2
        // Predicated region
        $region45: #{tpu_custom_call.1} parent=43 // pred_check
          %p316 = pneg %p107
        $region46: #{tpu_custom_call.1} parent=43 // pred_check_branch
          %318 = sbr.rel (%p316) target = $region48
        $region47: #{tpu_custom_call.1} parent=43 // pred_region
          %s319 = smul.u32 2, %s16
          %p320 = scmp.lt.s32.totalorder %s319, 15
          %s321 = scalar_select %p320, %s319, 15
          %s322 = smul.addr %s321, 8
          %s323 = scalar_lea.vmem %s3, %s322
        $region48: #{tpu_custom_call.1} parent=43 // pred_fallthru
          _
      $region44: #{tpu_custom_call.1} parent=5 // pred_fallthru
        _
    $region6: #{tpu_custom_call.1} parent=1 // loop_footer
      %s14 = sadd.s32 1, %s10
    $region7: #{tpu_custom_call.1} parent=1 // loop_footer_branch
      %9 = sbr.rel target = $region3
    $region8: #{tpu_custom_call.1} parent=1 // loop_exit
      _
    %324 = vsyncpa [#allocation3], 1
    %s325 = scalar_lea.sflag [#allocation3], 1
    %326 = vsyncpa %s325, 1

</llo_original>
